<compile_context>
chip_gen: v5e
topology: v5e:2x2
jax: 0.10.0
libtpu: 0.0.40
codegen_flags: <defaults>
</compile_context>

<pallas_src>
import jax
import jax.numpy as jnp
from jax.experimental import pallas as pl
from jax.experimental.pallas import tpu as pltpu

IMG_DIM = 7      # input features
K1 = IMG_DIM + 1 # layer-1 contraction padded with a ones row (bias fold)
H1 = 128         # first hidden width
H2 = 64          # second hidden width (logical)
H2P = 128        # second hidden width padded to a full lane register
OUT = 1

NEG_SLOPE_1 = 0.01
NEG_SLOPE_2 = 0.001


def _round_up(n, m):
    return ((n + m - 1) // m) * m


def _discriminator_kernel(x_ref, w1_ref, w2_ref, b2_ref, w3_ref, b3_ref,
                          o_ref):
    """One batch tile in transposed layout: x_aug (8, TB) -> probs (1, TB)."""
    # ---- Layer 1: [W1^T | b1] (128, 8) @ x_aug (8, TB) --------------------
    # Bias is folded via the ones row of x_aug; accumulate in f32.
    h1_t = jnp.dot(w1_ref[...], x_ref[...],
                   preferred_element_type=jnp.float32)            # (128, TB)
    h1_t = jnp.where(h1_t >= 0, h1_t, NEG_SLOPE_1 * h1_t)

    # ---- Layer 2: W2^T_pad (128, 128) @ h1_t ------------------------------
    # Rows 64..127 of W2^T_pad / b2 are zero, so the padded sublanes of h2_t
    # stay exactly 0 through the bias add and LeakyReLU.
    h2_t = jnp.dot(w2_ref[...], h1_t.astype(w2_ref.dtype),
                   preferred_element_type=jnp.float32)            # (128, TB)
    h2_t = h2_t + b2_ref[...]                                     # (128,1) bcast
    h2_t = jnp.where(h2_t >= 0, h2_t, NEG_SLOPE_2 * h2_t)

    # ---- Layer 3: w3_pad (1, 128) @ h2_t + b3, Sigmoid --------------------
    # Zero columns of padded w3 contribute nothing.  Output tile (1, TB) is
    # lane-dense -> unmasked stores, dense HBM writeback.
    logit_t = jnp.dot(w3_ref[...], h2_t,
                      preferred_element_type=jnp.float32)          # (1, TB)
    logit_t = logit_t + b3_ref[...]                                # (1,1) bcast
    # exp goes to the EUP; the divide is on a tiny (1, TB) tile (exact math,
    # so f32 results match the reference to ~ulp).
    o_ref[...] = (1.0 / (1.0 + jnp.exp(-logit_t))).astype(o_ref.dtype)


def prepare_params(params, compute_dtype=jnp.bfloat16):
    """Pad / transpose the logical parameters into the kernel layout (once).

    Keep the returned dict around and reuse it across forward calls so the
    padding/casting is not re-materialized by XLA every step.
    """
    # Layer 1: transpose, fold b1 as the 8th contraction column.
    w1a = jnp.concatenate(
        [params["w1"].T, params["b1"].reshape(H1, 1)], axis=1
    ).astype(compute_dtype)                                        # (128, 8)
    # Layer 2: transpose, zero-pad the 64 output rows up to 128.
    w2t = jnp.zeros((H2P, H1), compute_dtype).at[:H2, :].set(
        params["w2"].T.astype(compute_dtype))                      # (128, 128)
    b2 = jnp.zeros((H2P, 1), jnp.float32).at[:H2, 0].set(
        params["b2"].astype(jnp.float32))                          # (128, 1)
    # Layer 3: row vector over the padded hidden dim (kept f32; tiny matmul).
    w3 = jnp.zeros((1, H2P), jnp.float32).at[0, :H2].set(
        params["w3"].reshape(H2).astype(jnp.float32))              # (1, 128)
    b3 = params["b3"].reshape(1, 1).astype(jnp.float32)            # (1, 1)
    return {"w1a": w1a, "w2t": w2t, "b2": b2, "w3": w3, "b3": b3}


def discriminator_forward(x, prepared, *, block_b=2048):
    """Pallas forward pass.  x: (B, IMG_DIM) -> (B, 1) probabilities.

    block_b: max batch tile (multiple of 128).  Weights stay resident in
    VMEM; x/out tiles are pipelined.  For B > 256 the tile is capped so the
    grid has >= 2 steps (both v7x TensorCores get work).  B need not divide
    the tile (Pallas pads edge-block reads and masks edge-block writes).
    """
    assert block_b % 128 == 0, "block_b must be a multiple of 128"
    B = x.shape[0]
    compute_dtype = prepared["w1a"].dtype

    # Transposed, bias-augmented input: features on sublanes, batch on lanes.
    x_aug = jnp.concatenate(
        [x.T.astype(compute_dtype), jnp.ones((1, B), compute_dtype)], axis=0
    )                                                              # (8, B)

    if B <= 256:
        tb = B                              # single full-extent block
    else:
        tb = min(block_b, _round_up(pl.cdiv(B, 2), 128))
    grid = (pl.cdiv(B, tb),)

    w1a, w2t, b2, w3, b3 = (prepared["w1a"], prepared["w2t"], prepared["b2"],
                            prepared["w3"], prepared["b3"])

    cost = pl.CostEstimate(
        flops=2 * B * (IMG_DIM * H1 + H1 * H2 + H2 * OUT),
        transcendentals=B,                                   # sigmoid exp
        bytes_accessed=(x_aug.size * x_aug.dtype.itemsize + B * OUT * 4
                        + sum(int(a.size) * a.dtype.itemsize
                              for a in (w1a, w2t, b2, w3, b3))),
    )

    const = lambda i: (0, 0)   # weights: same block every step -> resident
    out_t = pl.pallas_call(
        _discriminator_kernel,
        out_shape=jax.ShapeDtypeStruct((1, B), jnp.float32),
        grid=grid,
        in_specs=[
            pl.BlockSpec((K1, tb), lambda i: (0, i)),        # x_aug (pipelined)
            pl.BlockSpec((H1, K1), const),                   # [W1^T | b1]
            pl.BlockSpec((H2P, H1), const),                  # W2^T (padded)
            pl.BlockSpec((H2P, 1), const),                   # b2   (padded)
            pl.BlockSpec((1, H2P), const),                   # w3   (padded row)
            pl.BlockSpec((1, OUT), const),                   # b3
        ],
        out_specs=pl.BlockSpec((1, tb), lambda i: (0, i)),   # lane-dense out
        compiler_params=pltpu.CompilerParams(
            dimension_semantics=("parallel",),   # shard batch over v7x's 2 TCs
        ),
        cost_estimate=cost,
    )(x_aug, w1a, w2t, b2, w3, b3)

    # (1, B) -> (B, 1): pure metadata reshape (same element order).
    return out_t.reshape(B, OUT)


def make_discriminator(params, *, compute_dtype=jnp.bfloat16, block_b=2048):
    """Prepare weights once and return a jitted forward closure."""
    prepared = prepare_params(params, compute_dtype)

    @jax.jit
    def fwd(x):
        return discriminator_forward(x, prepared, block_b=block_b)

    return fwd


def init_params(key):
    """Deterministic init matching nn.Linear shapes (kept as (in, out))."""
    k1, k2, k3, k4, k5, k6 = jax.random.split(key, 6)

    def uniform(k, shape, fan_in):
        bound = 1.0 / jnp.sqrt(fan_in)
        return jax.random.uniform(k, shape, jnp.float32, -bound, bound)

    return {
        "w1": uniform(k1, (IMG_DIM, H1), IMG_DIM),
        "b1": uniform(k2, (H1,), IMG_DIM),
        "w2": uniform(k3, (H1, H2), H1),
        "b2": uniform(k4, (H2,), H1),
        "w3": uniform(k5, (H2, OUT), H2),
        "b3": uniform(k6, (OUT,), H2),
    }


def reference_forward(x, p):
    h1 = x @ p["w1"] + p["b1"]
    h1 = jnp.where(h1 >= 0, h1, NEG_SLOPE_1 * h1)
    h2 = h1 @ p["w2"] + p["b2"]
    h2 = jnp.where(h2 >= 0, h2, NEG_SLOPE_2 * h2)
    h3 = h2 @ p["w3"] + p["b3"]
    return jax.nn.sigmoid(h3)


if __name__ == "__main__":
    key = jax.random.PRNGKey(0)
    pkey, xkey, xkey2, xkey3 = jax.random.split(key, 4)
    params = init_params(pkey)

    # --- exact f32 path, small single-block run (matches module spec) ------
    prep_f32 = prepare_params(params, jnp.float32)
    B = 8
    x = jax.random.normal(xkey, (B, IMG_DIM), jnp.float32)
    out = jax.block_until_ready(discriminator_forward(x, prep_f32))
    ref = reference_forward(x, params)
    assert out.shape == (B, OUT)
    assert jnp.allclose(out, ref, atol=1e-5, rtol=1e-5)

    # --- f32, multi-step grid with a partial edge tile (B % tb != 0) -------
    B2 = 300   # -> tb = 256, grid = (2,), second tile partially out-of-bounds
    x2 = jax.random.normal(xkey2, (B2, IMG_DIM), jnp.float32)
    out2 = jax.block_until_ready(discriminator_forward(x2, prep_f32))
    ref2 = reference_forward(x2, params)
    assert out2.shape == (B2, OUT)
    assert jnp.allclose(out2, ref2, atol=1e-5, rtol=1e-5)

    # --- default bf16 MXU operands (v6e/v7x), two-step grid, jitted --------
    # NOTE: bf16 quantizes x and the weights; accumulation/bias/activations
    # stay f32, so error is bounded to input/weight quantization.
    fwd_bf16 = make_discriminator(params)          # compute_dtype=bf16 default
    B3 = 512   # -> tb = 256, grid = (2,): both v7x TensorCores get work
    x3 = jax.random.normal(xkey3, (B3, IMG_DIM), jnp.float32)
    out3 = jax.block_until_ready(fwd_bf16(x3))
    ref3 = reference_forward(x3, params)
    assert out3.shape == (B3, OUT)
    assert jnp.allclose(out3, ref3, atol=5e-2, rtol=5e-2)

    print("KERNEL_OK")
</pallas_src>

<mosaic_0001>
module attributes {stable_mosaic.version = 11 : i64} {
  func.func @_discriminator_kernel(%arg0: i32, %arg1: memref<8x8xf32, #tpu.memory_space<vmem>>, %arg2: memref<128x8xf32, #tpu.memory_space<vmem>>, %arg3: memref<128x128xf32, #tpu.memory_space<vmem>>, %arg4: memref<128x1xf32, #tpu.memory_space<vmem>>, %arg5: memref<1x128xf32, #tpu.memory_space<vmem>>, %arg6: memref<1x1xf32, #tpu.memory_space<vmem>>, %arg7: memref<1x8xf32, #tpu.memory_space<vmem>>) attributes {dimension_semantics = [#tpu.dimension_semantics<parallel>], iteration_bounds = array<i64: 1>, scalar_prefetch = 0 : i64, scratch_operands = 0 : i64, tpu.core_type = #tpu.core_type<tc>, window_params = [{transform_indices = @transform_0, window_bounds = array<i64: 8, 8>}, {pipeline_mode = #tpu.pipeline_mode<synchronous>, transform_indices = @transform_1, window_bounds = array<i64: 128, 8>}, {pipeline_mode = #tpu.pipeline_mode<synchronous>, transform_indices = @transform_2, window_bounds = array<i64: 128, 128>}, {pipeline_mode = #tpu.pipeline_mode<synchronous>, transform_indices = @transform_3, window_bounds = array<i64: 128, 1>}, {pipeline_mode = #tpu.pipeline_mode<synchronous>, transform_indices = @transform_4, window_bounds = array<i64: 1, 128>}, {pipeline_mode = #tpu.pipeline_mode<synchronous>, transform_indices = @transform_5, window_bounds = array<i64: 1, 1>}, {transform_indices = @transform_6, window_bounds = array<i64: 1, 8>}]} {
    %c0 = arith.constant 0 : index
    %c0_0 = arith.constant 0 : index
    %0 = vector.load %arg2[%c0, %c0_0] : memref<128x8xf32, #tpu.memory_space<vmem>>, vector<128x8xf32>
    %c0_1 = arith.constant 0 : index
    %c0_2 = arith.constant 0 : index
    %1 = vector.load %arg1[%c0_1, %c0_2] : memref<8x8xf32, #tpu.memory_space<vmem>>, vector<8x8xf32>
    %cst = arith.constant dense<0.000000e+00> : vector<128x8xf32>
    %2 = tpu.matmul %0, %1, %cst {dimension_numbers = #tpu.dot_dimension_numbers<[1], [0], [0], [1], [0, 0, 1, 1], [], []>} : vector<128x8xf32>, vector<8x8xf32>, vector<128x8xf32> -> vector<128x8xf32>
    %cst_3 = arith.constant 0.000000e+00 : f32
    %3 = vector.broadcast %cst_3 : f32 to vector<128x8xf32>
    %4 = arith.cmpf oge, %2, %3 : vector<128x8xf32>
    %cst_4 = arith.constant 0.00999999977 : f32
    %5 = vector.broadcast %cst_4 : f32 to vector<128x8xf32>
    %6 = arith.mulf %5, %2 : vector<128x8xf32>
    %7 = arith.select %4, %2, %6 : vector<128x8xi1>, vector<128x8xf32>
    %c0_5 = arith.constant 0 : index
    %c0_6 = arith.constant 0 : index
    %8 = vector.load %arg3[%c0_5, %c0_6] : memref<128x128xf32, #tpu.memory_space<vmem>>, vector<128x128xf32>
    %cst_7 = arith.constant dense<0.000000e+00> : vector<128x8xf32>
    %9 = tpu.matmul %8, %7, %cst_7 {dimension_numbers = #tpu.dot_dimension_numbers<[1], [0], [0], [1], [0, 0, 1, 1], [], []>} : vector<128x128xf32>, vector<128x8xf32>, vector<128x8xf32> -> vector<128x8xf32>
    %c0_8 = arith.constant 0 : index
    %c0_9 = arith.constant 0 : index
    %10 = vector.load %arg4[%c0_8, %c0_9] : memref<128x1xf32, #tpu.memory_space<vmem>>, vector<128x1xf32>
    %11 = vector.broadcast %10 : vector<128x1xf32> to vector<128x8xf32>
    %12 = arith.addf %9, %11 : vector<128x8xf32>
    %cst_10 = arith.constant 0.000000e+00 : f32
    %13 = vector.broadcast %cst_10 : f32 to vector<128x8xf32>
    %14 = arith.cmpf oge, %12, %13 : vector<128x8xf32>
    %cst_11 = arith.constant 1.000000e-03 : f32
    %15 = vector.broadcast %cst_11 : f32 to vector<128x8xf32>
    %16 = arith.mulf %15, %12 : vector<128x8xf32>
    %17 = arith.select %14, %12, %16 : vector<128x8xi1>, vector<128x8xf32>
    %c0_12 = arith.constant 0 : index
    %c0_13 = arith.constant 0 : index
    %18 = vector.load %arg5[%c0_12, %c0_13] : memref<1x128xf32, #tpu.memory_space<vmem>>, vector<1x128xf32>
    %cst_14 = arith.constant dense<0.000000e+00> : vector<1x8xf32>
    %19 = tpu.matmul %18, %17, %cst_14 {dimension_numbers = #tpu.dot_dimension_numbers<[1], [0], [0], [1], [0, 0, 1, 1], [], []>} : vector<1x128xf32>, vector<128x8xf32>, vector<1x8xf32> -> vector<1x8xf32>
    %c0_15 = arith.constant 0 : index
    %c0_16 = arith.constant 0 : index
    %20 = vector.load %arg6[%c0_15, %c0_16] : memref<1x1xf32, #tpu.memory_space<vmem>>, vector<1x1xf32>
    %21 = vector.broadcast %20 : vector<1x1xf32> to vector<1x8xf32>
    %22 = arith.addf %19, %21 : vector<1x8xf32>
    %cst_17 = arith.constant 0.000000e+00 : f32
    %23 = vector.broadcast %cst_17 : f32 to vector<1x8xf32>
    %24 = arith.subf %23, %22 : vector<1x8xf32>
    %25 = math.exp %24 : vector<1x8xf32>
    %cst_18 = arith.constant 1.000000e+00 : f32
    %26 = vector.broadcast %cst_18 : f32 to vector<1x8xf32>
    %27 = arith.addf %26, %25 : vector<1x8xf32>
    %cst_19 = arith.constant 1.000000e+00 : f32
    %28 = vector.broadcast %cst_19 : f32 to vector<1x8xf32>
    %29 = arith.divf %28, %27 : vector<1x8xf32>
    %c0_20 = arith.constant 0 : index
    %c0_21 = arith.constant 0 : index
    %30 = vector.load %arg7[%c0_20, %c0_21] : memref<1x8xf32, #tpu.memory_space<vmem>>, vector<1x8xf32>
    tpu.vector_store %arg7[%c0_20, %c0_21], %29 {strides = array<i32>} : memref<1x8xf32, #tpu.memory_space<vmem>>, vector<1x8xf32>,
    return
  }
  func.func @transform_0(%arg0: i32) -> (i32, i32) {
    %c0_i32 = arith.constant 0 : i32
    %c0_i32_0 = arith.constant 0 : i32
    return %c0_i32, %arg0 : i32, i32
  }
  func.func @transform_1(%arg0: i32) -> (i32, i32) {
    %c0_i32 = arith.constant 0 : i32
    %c0_i32_0 = arith.constant 0 : i32
    %c0_i32_1 = arith.constant 0 : i32
    return %c0_i32, %c0_i32_0 : i32, i32
  }
  func.func @transform_2(%arg0: i32) -> (i32, i32) {
    %c0_i32 = arith.constant 0 : i32
    %c0_i32_0 = arith.constant 0 : i32
    %c0_i32_1 = arith.constant 0 : i32
    return %c0_i32, %c0_i32_0 : i32, i32
  }
  func.func @transform_3(%arg0: i32) -> (i32, i32) {
    %c0_i32 = arith.constant 0 : i32
    %c0_i32_0 = arith.constant 0 : i32
    %c0_i32_1 = arith.constant 0 : i32
    return %c0_i32, %c0_i32_0 : i32, i32
  }
  func.func @transform_4(%arg0: i32) -> (i32, i32) {
    %c0_i32 = arith.constant 0 : i32
    %c0_i32_0 = arith.constant 0 : i32
    %c0_i32_1 = arith.constant 0 : i32
    return %c0_i32, %c0_i32_0 : i32, i32
  }
  func.func @transform_5(%arg0: i32) -> (i32, i32) {
    %c0_i32 = arith.constant 0 : i32
    %c0_i32_0 = arith.constant 0 : i32
    %c0_i32_1 = arith.constant 0 : i32
    return %c0_i32, %c0_i32_0 : i32, i32
  }
  func.func @transform_6(%arg0: i32) -> (i32, i32) {
    %c0_i32 = arith.constant 0 : i32
    %c0_i32_0 = arith.constant 0 : i32
    return %c0_i32, %arg0 : i32, i32
  }
}

</mosaic_0001>

<llo_original>
// kernel: tpu_custom_call.1
$region0: #{tpu_custom_call.1}
  #allocation0 [shape = 'u32[]', space=smem, size = 0x4, offset = 0x4, fixed_abs, tag = 'smem constant byte address 0x4 - core index']
  #allocation1 [shape = 'u32[72,128]{1,0:T(1,128)}', space=vmem, size = 0x9000, scoped, tag = 'internal scratch']
  #allocation2 [shape = 'f32[1,1]{1,0:T(1,128)S(1)}', space=vmem, size = 0x200, scoped, tag = 'scoped memory for tpu_custom_call.1']
  %s0 = inlined_call_operand.vmem [shape: f32[8,8], index: 0, kind: input, shape index: {}]
  %s1 = inlined_call_operand.vmem [shape: f32[128,8], index: 1, kind: input, shape index: {}]
  %s2 = inlined_call_operand.vmem [shape: f32[128,128], index: 2, kind: input, shape index: {}]
  %s3 = inlined_call_operand.vmem [shape: f32[128,1], index: 3, kind: input, shape index: {}]
  %s4 = inlined_call_operand.vmem [shape: f32[1,128], index: 4, kind: input, shape index: {}]
  %s5 = inlined_call_operand.<no memory space> [shape: f32[1,1], index: 5, kind: input, shape index: {}]
  %s6 = inlined_call_operand.hbm [shape: f32[1,8], index: 6, kind: output, shape index: {}]
  %s7 = sld [smem:[#allocation0]]
  $region34: #{tpu_custom_call.1} parent=0
    _
  %s9 = ssub.s32 1, %s7
  %s10 = scalar_select 0, %s9, %s7
  %v11 = vstv %s5
  %12 = vst [vmem:[#allocation2] sm:$0x1] %v11
  $region1: #{tpu_custom_call.1} parent=0
    #allocation3 [shape = 'u8[512]{0}', space=vmem, size = 0x400, scoped, tag = 'output window, operand 0, single buffered']
    #allocation4 [shape = 's32[1]{0}', space=sflag, size = 0x4, scoped, tag = 'scoped memory for tpu_custom_call.1']
    %13 = vsyncpa [#allocation4], 0
    // Predicated region
    $region2: #{tpu_custom_call.1} parent=1 // pred_check
      _
    $region3: #{tpu_custom_call.1} parent=1 // pred_check_branch
      %15 = sbr.rel (0) target = $region5
    $region4: #{tpu_custom_call.1} parent=1 // pred_region
      _
    $region5: #{tpu_custom_call.1} parent=1 // pred_fallthru
      _
    // Predicated region
    $region6: #{tpu_custom_call.1} parent=1 // pred_check
      _
    $region7: #{tpu_custom_call.1} parent=1 // pred_check_branch
      %17 = sbr.rel (0) target = $region9
    $region8: #{tpu_custom_call.1} parent=1 // pred_region
      _
    $region9: #{tpu_custom_call.1} parent=1 // pred_fallthru
      _
    // Predicated region
    $region10: #{tpu_custom_call.1} parent=1 // pred_check
      _
    $region11: #{tpu_custom_call.1} parent=1 // pred_check_branch
      %19 = sbr.rel (0) target = $region13
    $region12: #{tpu_custom_call.1} parent=1 // pred_region
      _
    $region13: #{tpu_custom_call.1} parent=1 // pred_fallthru
      _
    // Predicated region
    $region14: #{tpu_custom_call.1} parent=1 // pred_check
      _
    $region15: #{tpu_custom_call.1} parent=1 // pred_check_branch
      %21 = sbr.rel (0) target = $region17
    $region16: #{tpu_custom_call.1} parent=1 // pred_region
      _
    $region17: #{tpu_custom_call.1} parent=1 // pred_fallthru
      _
    // Predicated region
    $region18: #{tpu_custom_call.1} parent=1 // pred_check
      _
    $region19: #{tpu_custom_call.1} parent=1 // pred_check_branch
      %23 = sbr.rel (0) target = $region21
    $region20: #{tpu_custom_call.1} parent=1 // pred_region
      _
    $region21: #{tpu_custom_call.1} parent=1 // pred_fallthru
      _
    // Predicated region
    $region22: #{tpu_custom_call.1} parent=1 // pred_check
      _
    $region23: #{tpu_custom_call.1} parent=1 // pred_check_branch
      %25 = sbr.rel (0) target = $region25
    $region24: #{tpu_custom_call.1} parent=1 // pred_region
      _
    $region25: #{tpu_custom_call.1} parent=1 // pred_fallthru
      _
    %v26 = vld [vmem:[%s1] sm:$0xff]
    %v27 = vld [vmem:[%s1 + $0x8] sm:$0xff]
    %v28 = vld [vmem:[%s1 + $0x10] sm:$0xff]
    %v29 = vld [vmem:[%s1 + $0x18] sm:$0xff]
    %v30 = vld [vmem:[%s1 + $0x20] sm:$0xff]
    %v31 = vld [vmem:[%s1 + $0x28] sm:$0xff]
    %v32 = vld [vmem:[%s1 + $0x30] sm:$0xff]
    %v33 = vld [vmem:[%s1 + $0x38] sm:$0xff]
    %v34 = vld [vmem:[%s1 + $0x40] sm:$0xff]
    %v35 = vld [vmem:[%s1 + $0x48] sm:$0xff]
    %v36 = vld [vmem:[%s1 + $0x50] sm:$0xff]
    %v37 = vld [vmem:[%s1 + $0x58] sm:$0xff]
    %v38 = vld [vmem:[%s1 + $0x60] sm:$0xff]
    %v39 = vld [vmem:[%s1 + $0x68] sm:$0xff]
    %v40 = vld [vmem:[%s1 + $0x70] sm:$0xff]
    %v41 = vld [vmem:[%s1 + $0x78] sm:$0xff]
    %v42 = vld [vmem:[%s0] sm:$0xff]
    %vm43 = vcmask 64512
    %v45 = vsel %vm43, %v26, 0
    %v48 = vsel %vm43, %v27, 0
    %v51 = vsel %vm43, %v28, 0
    %v54 = vsel %vm43, %v29, 0
    %v57 = vsel %vm43, %v30, 0
    %v60 = vsel %vm43, %v31, 0
    %v63 = vsel %vm43, %v32, 0
    %v66 = vsel %vm43, %v33, 0
    %v69 = vsel %vm43, %v34, 0
    %v72 = vsel %vm43, %v35, 0
    %v75 = vsel %vm43, %v36, 0
    %v78 = vsel %vm43, %v37, 0
    %v81 = vsel %vm43, %v38, 0
    %v84 = vsel %vm43, %v39, 0
    %v87 = vsel %vm43, %v40, 0
    %v90 = vsel %vm43, %v41, 0
    %92 = vmatpush.msra.mxu0 0.0
    %93 = vmatpush.msra.mxu0 0.0
    %94 = vmatpush.msra.mxu0 0.0
    %95 = vmatpush.msra.mxu0 0.0
    %96 = vmatpush.msra.mxu0 0.0
    %97 = vmatpush.msra.mxu0 0.0
    %98 = vmatpush.msra.mxu0 0.0
    %99 = vmatpush.msra.mxu0 0.0
    %100 = vmatpush.msra.mxu0 0.0
    %101 = vmatpush.msra.mxu0 0.0
    %102 = vmatpush.msra.mxu0 0.0
    %103 = vmatpush.msra.mxu0 0.0
    %104 = vmatpush.msra.mxu0 0.0
    %105 = vmatpush.msra.mxu0 0.0
    %106 = vmatpush.msra.mxu0 0.0
    %107 = vmatpush.msra.mxu0 %v42
    %108 = vmatmul.f32.gmra.mxu0 %v45
    %v109 = vpop.f32.mrf.mxu0
    %v110 = vadd.f32 0.0, %v109
    %111 = vmatmul.f32.gmra.mxu0 %v48
    %v112 = vpop.f32.mrf.mxu0
    %v113 = vadd.f32 0.0, %v112
    %114 = vmatmul.f32.gmra.mxu0 %v51
    %v115 = vpop.f32.mrf.mxu0
    %v116 = vadd.f32 0.0, %v115
    %117 = vmatmul.f32.gmra.mxu0 %v54
    %v118 = vpop.f32.mrf.mxu0
    %v119 = vadd.f32 0.0, %v118
    %120 = vmatmul.f32.gmra.mxu0 %v57
    %v121 = vpop.f32.mrf.mxu0
    %v122 = vadd.f32 0.0, %v121
    %123 = vmatmul.f32.gmra.mxu0 %v60
    %v124 = vpop.f32.mrf.mxu0
    %v125 = vadd.f32 0.0, %v124
    %126 = vmatmul.f32.gmra.mxu0 %v63
    %v127 = vpop.f32.mrf.mxu0
    %v128 = vadd.f32 0.0, %v127
    %129 = vmatmul.f32.gmra.mxu0 %v66
    %v130 = vpop.f32.mrf.mxu0
    %v131 = vadd.f32 0.0, %v130
    %132 = vmatmul.f32.gmra.mxu0 %v69
    %v133 = vpop.f32.mrf.mxu0
    %v134 = vadd.f32 0.0, %v133
    %135 = vmatmul.f32.gmra.mxu0 %v72
    %v136 = vpop.f32.mrf.mxu0
    %v137 = vadd.f32 0.0, %v136
    %138 = vmatmul.f32.gmra.mxu0 %v75
    %v139 = vpop.f32.mrf.mxu0
    %v140 = vadd.f32 0.0, %v139
    %141 = vmatmul.f32.gmra.mxu0 %v78
    %v142 = vpop.f32.mrf.mxu0
    %v143 = vadd.f32 0.0, %v142
    %144 = vmatmul.f32.gmra.mxu0 %v81
    %v145 = vpop.f32.mrf.mxu0
    %v146 = vadd.f32 0.0, %v145
    %147 = vmatmul.f32.gmra.mxu0 %v84
    %v148 = vpop.f32.mrf.mxu0
    %v149 = vadd.f32 0.0, %v148
    %150 = vmatmul.f32.gmra.mxu0 %v87
    %v151 = vpop.f32.mrf.mxu0
    %v152 = vadd.f32 0.0, %v151
    %153 = vmatmul.f32.gmra.mxu0 %v90
    %v154 = vpop.f32.mrf.mxu0
    %v155 = vadd.f32 0.0, %v154
    %156 = vdwg.mxu0
    %vm157 = vcmp.ge.f32.partialorder %v110, 0.0
    %vm158 = vcmp.ge.f32.partialorder %v113, 0.0
    %vm159 = vcmp.ge.f32.partialorder %v116, 0.0
    %vm160 = vcmp.ge.f32.partialorder %v119, 0.0
    %vm161 = vcmp.ge.f32.partialorder %v122, 0.0
    %vm162 = vcmp.ge.f32.partialorder %v125, 0.0
    %vm163 = vcmp.ge.f32.partialorder %v128, 0.0
    %vm164 = vcmp.ge.f32.partialorder %v131, 0.0
    %vm165 = vcmp.ge.f32.partialorder %v134, 0.0
    %vm166 = vcmp.ge.f32.partialorder %v137, 0.0
    %vm167 = vcmp.ge.f32.partialorder %v140, 0.0
    %vm168 = vcmp.ge.f32.partialorder %v143, 0.0
    %vm169 = vcmp.ge.f32.partialorder %v146, 0.0
    %vm170 = vcmp.ge.f32.partialorder %v149, 0.0
    %vm171 = vcmp.ge.f32.partialorder %v152, 0.0
    %vm172 = vcmp.ge.f32.partialorder %v155, 0.0
    %v173 = vmul.f32 %v110, 0.01
    %v174 = vmul.f32 %v113, 0.01
    %v175 = vmul.f32 %v116, 0.01
    %v176 = vmul.f32 %v119, 0.01
    %v177 = vmul.f32 %v122, 0.01
    %v178 = vmul.f32 %v125, 0.01
    %v179 = vmul.f32 %v128, 0.01
    %v180 = vmul.f32 %v131, 0.01
    %v181 = vmul.f32 %v134, 0.01
    %v182 = vmul.f32 %v137, 0.01
    %v183 = vmul.f32 %v140, 0.01
    %v184 = vmul.f32 %v143, 0.01
    %v185 = vmul.f32 %v146, 0.01
    %v186 = vmul.f32 %v149, 0.01
    %v187 = vmul.f32 %v152, 0.01
    %v188 = vmul.f32 %v155, 0.01
    %v189 = vsel %vm157, %v110, %v173
    %v190 = vsel %vm158, %v113, %v174
    %v191 = vsel %vm159, %v116, %v175
    %v192 = vsel %vm160, %v119, %v176
    %v193 = vsel %vm161, %v122, %v177
    %v194 = vsel %vm162, %v125, %v178
    %v195 = vsel %vm163, %v128, %v179
    %v196 = vsel %vm164, %v131, %v180
    %v197 = vsel %vm165, %v134, %v181
    %v198 = vsel %vm166, %v137, %v182
    %v199 = vsel %vm167, %v140, %v183
    %v200 = vsel %vm168, %v143, %v184
    %v201 = vsel %vm169, %v146, %v185
    %v202 = vsel %vm170, %v149, %v186
    %v203 = vsel %vm171, %v152, %v187
    %v204 = vsel %vm172, %v155, %v188
    %v205 = vld [vmem:[%s2] sm:$0xff]
    %v206 = vld [vmem:[%s2 + $0x8] sm:$0xff]
    %v207 = vld [vmem:[%s2 + $0x10] sm:$0xff]
    %v208 = vld [vmem:[%s2 + $0x18] sm:$0xff]
    %v209 = vld [vmem:[%s2 + $0x20] sm:$0xff]
    %v210 = vld [vmem:[%s2 + $0x28] sm:$0xff]
    %v211 = vld [vmem:[%s2 + $0x30] sm:$0xff]
    %v212 = vld [vmem:[%s2 + $0x38] sm:$0xff]
    %v213 = vld [vmem:[%s2 + $0x40] sm:$0xff]
    %v214 = vld [vmem:[%s2 + $0x48] sm:$0xff]
    %v215 = vld [vmem:[%s2 + $0x50] sm:$0xff]
    %v216 = vld [vmem:[%s2 + $0x58] sm:$0xff]
    %v217 = vld [vmem:[%s2 + $0x60] sm:$0xff]
    %v218 = vld [vmem:[%s2 + $0x68] sm:$0xff]
    %v219 = vld [vmem:[%s2 + $0x70] sm:$0xff]
    %v220 = vld [vmem:[%s2 + $0x78] sm:$0xff]
    %v221 = vld [vmem:[%s3] sm:$0xff]
    %v222 = vld [vmem:[%s3 + $0x8] sm:$0xff]
    %v223 = vld [vmem:[%s3 + $0x10] sm:$0xff]
    %v224 = vld [vmem:[%s3 + $0x18] sm:$0xff]
    %v225 = vld [vmem:[%s3 + $0x20] sm:$0xff]
    %v226 = vld [vmem:[%s3 + $0x28] sm:$0xff]
    %v227 = vld [vmem:[%s3 + $0x30] sm:$0xff]
    %v228 = vld [vmem:[%s3 + $0x38] sm:$0xff]
    %v229 = vld [vmem:[%s3 + $0x40] sm:$0xff]
    %v230 = vld [vmem:[%s3 + $0x48] sm:$0xff]
    %v231 = vld [vmem:[%s3 + $0x50] sm:$0xff]
    %v232 = vld [vmem:[%s3 + $0x58] sm:$0xff]
    %v233 = vld [vmem:[%s3 + $0x60] sm:$0xff]
    %v234 = vld [vmem:[%s3 + $0x68] sm:$0xff]
    %v235 = vld [vmem:[%s3 + $0x70] sm:$0xff]
    %v236 = vld [vmem:[%s3 + $0x78] sm:$0xff]
    %238 = vset.pattern.permute.xlu0 0
    %239 = vperm.xlu0 %238, %v221
    %v240 = vpop.permute.xlu0 %239
    %243 = vset.pattern.permute.xlu0 0
    %244 = vperm.xlu0 %243, %v222
    %v245 = vpop.permute.xlu0 %244
    %248 = vset.pattern.permute.xlu0 0
    %249 = vperm.xlu0 %248, %v223
    %v250 = vpop.permute.xlu0 %249
    %253 = vset.pattern.permute.xlu0 0
    %254 = vperm.xlu0 %253, %v224
    %v255 = vpop.permute.xlu0 %254
    %258 = vset.pattern.permute.xlu0 0
    %259 = vperm.xlu0 %258, %v225
    %v260 = vpop.permute.xlu0 %259
    %263 = vset.pattern.permute.xlu0 0
    %264 = vperm.xlu0 %263, %v226
    %v265 = vpop.permute.xlu0 %264
    %268 = vset.pattern.permute.xlu0 0
    %269 = vperm.xlu0 %268, %v227
    %v270 = vpop.permute.xlu0 %269
    %273 = vset.pattern.permute.xlu0 0
    %274 = vperm.xlu0 %273, %v228
    %v275 = vpop.permute.xlu0 %274
    %278 = vset.pattern.permute.xlu0 0
    %279 = vperm.xlu0 %278, %v229
    %v280 = vpop.permute.xlu0 %279
    %283 = vset.pattern.permute.xlu0 0
    %284 = vperm.xlu0 %283, %v230
    %v285 = vpop.permute.xlu0 %284
    %288 = vset.pattern.permute.xlu0 0
    %289 = vperm.xlu0 %288, %v231
    %v290 = vpop.permute.xlu0 %289
    %293 = vset.pattern.permute.xlu0 0
    %294 = vperm.xlu0 %293, %v232
    %v295 = vpop.permute.xlu0 %294
    %298 = vset.pattern.permute.xlu0 0
    %299 = vperm.xlu0 %298, %v233
    %v300 = vpop.permute.xlu0 %299
    %303 = vset.pattern.permute.xlu0 0
    %304 = vperm.xlu0 %303, %v234
    %v305 = vpop.permute.xlu0 %304
    %308 = vset.pattern.permute.xlu0 0
    %309 = vperm.xlu0 %308, %v235
    %v310 = vpop.permute.xlu0 %309
    %313 = vset.pattern.permute.xlu0 0
    %314 = vperm.xlu0 %313, %v236
    %v315 = vpop.permute.xlu0 %314
    %317 = vmatpush.msra.mxu0 %v204
    %318 = vmatpush.msra.mxu0 %v203
    %319 = vmatpush.msra.mxu0 %v202
    %320 = vmatpush.msra.mxu0 %v201
    %321 = vmatpush.msra.mxu0 %v200
    %322 = vmatpush.msra.mxu0 %v199
    %323 = vmatpush.msra.mxu0 %v198
    %324 = vmatpush.msra.mxu0 %v197
    %325 = vmatpush.msra.mxu0 %v196
    %326 = vmatpush.msra.mxu0 %v195
    %327 = vmatpush.msra.mxu0 %v194
    %328 = vmatpush.msra.mxu0 %v193
    %329 = vmatpush.msra.mxu0 %v192
    %330 = vmatpush.msra.mxu0 %v191
    %331 = vmatpush.msra.mxu0 %v190
    %332 = vmatpush.msra.mxu0 %v189
    %333 = vmatmul.f32.gmra.mxu0 %v205
    %v334 = vpop.f32.mrf.mxu0
    %v335 = vadd.f32 %v240, %v334
    %336 = vmatmul.f32.gmra.mxu0 %v206
    %v337 = vpop.f32.mrf.mxu0
    %v338 = vadd.f32 %v245, %v337
    %339 = vmatmul.f32.gmra.mxu0 %v207
    %v340 = vpop.f32.mrf.mxu0
    %v341 = vadd.f32 %v250, %v340
    %342 = vmatmul.f32.gmra.mxu0 %v208
    %v343 = vpop.f32.mrf.mxu0
    %v344 = vadd.f32 %v255, %v343
    %345 = vmatmul.f32.gmra.mxu0 %v209
    %v346 = vpop.f32.mrf.mxu0
    %v347 = vadd.f32 %v260, %v346
    %348 = vmatmul.f32.gmra.mxu0 %v210
    %v349 = vpop.f32.mrf.mxu0
    %v350 = vadd.f32 %v265, %v349
    %351 = vmatmul.f32.gmra.mxu0 %v211
    %v352 = vpop.f32.mrf.mxu0
    %v353 = vadd.f32 %v270, %v352
    %354 = vmatmul.f32.gmra.mxu0 %v212
    %v355 = vpop.f32.mrf.mxu0
    %v356 = vadd.f32 %v275, %v355
    %357 = vmatmul.f32.gmra.mxu0 %v213
    %v358 = vpop.f32.mrf.mxu0
    %v359 = vadd.f32 %v280, %v358
    %360 = vmatmul.f32.gmra.mxu0 %v214
    %v361 = vpop.f32.mrf.mxu0
    %v362 = vadd.f32 %v285, %v361
    %363 = vmatmul.f32.gmra.mxu0 %v215
    %v364 = vpop.f32.mrf.mxu0
    %v365 = vadd.f32 %v290, %v364
    %366 = vmatmul.f32.gmra.mxu0 %v216
    %v367 = vpop.f32.mrf.mxu0
    %v368 = vadd.f32 %v295, %v367
    %369 = vmatmul.f32.gmra.mxu0 %v217
    %v370 = vpop.f32.mrf.mxu0
    %v371 = vadd.f32 %v300, %v370
    %372 = vmatmul.f32.gmra.mxu0 %v218
    %v373 = vpop.f32.mrf.mxu0
    %v374 = vadd.f32 %v305, %v373
    %375 = vmatmul.f32.gmra.mxu0 %v219
    %v376 = vpop.f32.mrf.mxu0
    %v377 = vadd.f32 %v310, %v376
    %378 = vmatmul.f32.gmra.mxu0 %v220
    %v379 = vpop.f32.mrf.mxu0
    %v380 = vadd.f32 %v315, %v379
    %381 = vdwg.mxu0
    %vm382 = vcmp.ge.f32.partialorder %v335, 0.0
    %vm383 = vcmp.ge.f32.partialorder %v338, 0.0
    %vm384 = vcmp.ge.f32.partialorder %v341, 0.0
    %vm385 = vcmp.ge.f32.partialorder %v344, 0.0
    %vm386 = vcmp.ge.f32.partialorder %v347, 0.0
    %vm387 = vcmp.ge.f32.partialorder %v350, 0.0
    %vm388 = vcmp.ge.f32.partialorder %v353, 0.0
    %vm389 = vcmp.ge.f32.partialorder %v356, 0.0
    %vm390 = vcmp.ge.f32.partialorder %v359, 0.0
    %vm391 = vcmp.ge.f32.partialorder %v362, 0.0
    %vm392 = vcmp.ge.f32.partialorder %v365, 0.0
    %vm393 = vcmp.ge.f32.partialorder %v368, 0.0
    %vm394 = vcmp.ge.f32.partialorder %v371, 0.0
    %vm395 = vcmp.ge.f32.partialorder %v374, 0.0
    %vm396 = vcmp.ge.f32.partialorder %v377, 0.0
    %vm397 = vcmp.ge.f32.partialorder %v380, 0.0
    %v398 = vmul.f32 %v335, 0.001
    %v399 = vmul.f32 %v338, 0.001
    %v400 = vmul.f32 %v341, 0.001
    %v401 = vmul.f32 %v344, 0.001
    %v402 = vmul.f32 %v347, 0.001
    %v403 = vmul.f32 %v350, 0.001
    %v404 = vmul.f32 %v353, 0.001
    %v405 = vmul.f32 %v356, 0.001
    %v406 = vmul.f32 %v359, 0.001
    %v407 = vmul.f32 %v362, 0.001
    %v408 = vmul.f32 %v365, 0.001
    %v409 = vmul.f32 %v368, 0.001
    %v410 = vmul.f32 %v371, 0.001
    %v411 = vmul.f32 %v374, 0.001
    %v412 = vmul.f32 %v377, 0.001
    %v413 = vmul.f32 %v380, 0.001
    %v414 = vsel %vm382, %v335, %v398
    %v415 = vsel %vm383, %v338, %v399
    %v416 = vsel %vm384, %v341, %v400
    %v417 = vsel %vm385, %v344, %v401
    %v418 = vsel %vm386, %v347, %v402
    %v419 = vsel %vm387, %v350, %v403
    %v420 = vsel %vm388, %v353, %v404
    %v421 = vsel %vm389, %v356, %v405
    %v422 = vsel %vm390, %v359, %v406
    %v423 = vsel %vm391, %v362, %v407
    %v424 = vsel %vm392, %v365, %v408
    %v425 = vsel %vm393, %v368, %v409
    %v426 = vsel %vm394, %v371, %v410
    %v427 = vsel %vm395, %v374, %v411
    %v428 = vsel %vm396, %v377, %v412
    %v429 = vsel %vm397, %v380, %v413
    %v430 = vld [vmem:[%s4] sm:$0x1]
    %v431 = vld [vmem:[#allocation2] sm:$0x1]
    %433 = vset.pattern.permute.xlu0 0
    %434 = vperm.xlu0 %433, %v431
    %v435 = vpop.permute.xlu0 %434
    %v437 = vperm.slane %v435, 0
    %438 = vmatpush.msra.mxu0 %v429
    %439 = vmatpush.msra.mxu0 %v428
    %440 = vmatpush.msra.mxu0 %v427
    %441 = vmatpush.msra.mxu0 %v426
    %442 = vmatpush.msra.mxu0 %v425
    %443 = vmatpush.msra.mxu0 %v424
    %444 = vmatpush.msra.mxu0 %v423
    %445 = vmatpush.msra.mxu0 %v422
    %446 = vmatpush.msra.mxu0 %v421
    %447 = vmatpush.msra.mxu0 %v420
    %448 = vmatpush.msra.mxu0 %v419
    %449 = vmatpush.msra.mxu0 %v418
    %450 = vmatpush.msra.mxu0 %v417
    %451 = vmatpush.msra.mxu0 %v416
    %452 = vmatpush.msra.mxu0 %v415
    %453 = vmatpush.msra.mxu0 %v414
    %454 = vmatmul.f32.gmra.mxu0 %v430
    %v455 = vpop.f32.mrf.mxu0
    %v456 = vadd.f32 %v437, %v455
    %457 = vdwg.mxu0
    %v458 = vsub.f32 0.0, %v456
    %v459 = vmul.f32 %v458, 1.442695
    %v460 = vpow.pop %v459
    %v461 = vadd.f32 %v460, 1.0
    %v462 = vrcp.pop %v461
    %v463 = vmul.f32 %v461, %v462
    %v464 = vsub.f32 1.0, %v463
    %v465 = vmul.f32 %v462, %v464
    %v466 = vadd.f32 %v462, %v465
    %vm467 = vweird.f32 %v461
    %vm468 = vweird.f32 %v462
    %vm469 = vmor %vm467, %vm468
    %v470 = vsel %vm469, %v462, %v466
    %v471 = vand.u32 2147483647, %v461
    %vm472 = vcmp.eq.f32.partialorder %v471, 8.507059e+37
    %v473 = vand.u32 %v461, 2147483648
    %v474 = vor.u32 1.1754944e-38, %v473
    %v475 = vsel %vm472, %v474, %v470
    %v476 = vmul.f32 1.0, %v475
    %vm477 = vcmask 57344
    %478 = vst.msk [vmem:[#allocation3] sm:$0x1] %vm477, %v476
    // Predicated region
    $region26: #{tpu_custom_call.1} parent=1 // pred_check
      _
    $region27: #{tpu_custom_call.1} parent=1 // pred_check_branch
      %480 = sbr.rel (0) target = $region29
    $region28: #{tpu_custom_call.1} parent=1 // pred_region
      %482 = vsyncadd [#allocation4], 0
      %s484 = sshll.u32 [#allocation3], 4
      %s485 = int_to_ptr.vmem [resolvable:$true] %s484
      %s486 = sshll.u32 %s6, 4
      %s487 = int_to_ptr.hbm [resolvable:$true] %s486
      %489 = dma.vmem_to_hbm [thread:$0]  %s485, 16, %s487, [#allocation4]
    $region29: #{tpu_custom_call.1} parent=1 // pred_fallthru
      _
    // Predicated region
    $region30: #{tpu_custom_call.1} parent=1 // pred_check
      _
    $region31: #{tpu_custom_call.1} parent=1 // pred_check_branch
      %491 = sbr.rel (0) target = $region33
    $region32: #{tpu_custom_call.1} parent=1 // pred_region
      %493 = dma.done [#allocation4], 16
    $region33: #{tpu_custom_call.1} parent=1 // pred_fallthru
      _
    %494 = vsyncpa [#allocation4], 1

</llo_original>
